<compile_context>
chip_gen: v7x
topology: tpu7x:2x2x1
jax: 0.10.0
libtpu: 0.0.40
codegen_flags: <defaults>
</compile_context>

<pallas_src>
import functools

import jax
import jax.numpy as jnp
from jax.experimental import pallas as pl
from jax.experimental.pallas import tpu as pltpu

_LANE = 128
_SUBLANE = 16            # multiple of 16 -> valid for f32 and bf16 tiling
_DEFAULT_MAX_ROWS = 4096  # 4096 rows * 128 lanes = 512K samples per grid step


def _round_up(n, m):
    return ((n + m - 1) // m) * m


def _linear2_relu_kernel(w_ref, b_ref, x_ref, o_ref):
    # w_ref: SMEM (2,) f32, b_ref: SMEM (1,) f32
    # x_ref: VMEM (2, TR, 128), o_ref: VMEM (TR, 128)
    x0 = x_ref[0].astype(jnp.float32)        # (TR, 128) dense vregs
    x1 = x_ref[1].astype(jnp.float32)
    y = x0 * w_ref[0] + x1 * w_ref[1] + b_ref[0]   # pure VPU: 2 FMAs + add
    o_ref[...] = jnp.maximum(y, 0.0).astype(o_ref.dtype)


@functools.partial(jax.jit, static_argnames=("feature_major", "max_rows"))
def pruning_acc_estimator_forward(x, weight, bias, *, feature_major=False,
                                  max_rows=_DEFAULT_MAX_ROWS):
    """Forward pass of PruningAccEstimator: relu(x @ weight.T + bias).

    x:      (B, 2) float32/bfloat16   (PyTorch layout), or (2, B) if
            feature_major=True (avoids the wrapper transpose pass entirely).
    weight: (1, 2) float32   (PyTorch nn.Linear layout)
    bias:   (1,)   float32
    returns (B, 1) in x.dtype
    """
    if feature_major:
        assert x.ndim == 2 and x.shape[0] == 2, "feature-major input must be (2, B)"
        batch = x.shape[1]
        x_fm = x                                   # (2, B), no copy
    else:
        assert x.ndim == 2 and x.shape[1] == 2, "input must be (B, 2)"
        batch = x.shape[0]
        x_fm = jnp.transpose(x)                    # (2, B); fuses with pad/reshape

    # --- tiling: sublane-dense rows of 128 lanes --------------------------
    nb = pl.cdiv(batch, _LANE)                     # number of 128-lane rows
    max_rows = max(_SUBLANE, _round_up(max_rows, _SUBLANE))
    # >=2 grid steps whenever there is enough work (v7x megacore), big tiles
    # for large B, and padding bounded by ~8*num_tiles rows.
    num_tiles = 1 if nb <= _SUBLANE else max(2, pl.cdiv(nb, max_rows))
    tile_rows = _round_up(pl.cdiv(nb, num_tiles), _SUBLANE)
    nb_pad = num_tiles * tile_rows
    total = nb_pad * _LANE

    if total != batch:
        x_fm = jnp.pad(x_fm, ((0, 0), (0, total - batch)))
    x3 = x_fm.reshape(2, nb_pad, _LANE)            # free row-major reshape

    w_s = weight.reshape(2).astype(jnp.float32)    # (2,) -> SMEM scalars
    b_s = bias.reshape(1).astype(jnp.float32)      # (1,) -> SMEM scalar

    out = pl.pallas_call(
        _linear2_relu_kernel,
        out_shape=jax.ShapeDtypeStruct((nb_pad, _LANE), x.dtype),
        grid=(num_tiles,),
        in_specs=[
            pl.BlockSpec(memory_space=pltpu.MemorySpace.SMEM),       # weight
            pl.BlockSpec(memory_space=pltpu.MemorySpace.SMEM),       # bias
            pl.BlockSpec((2, tile_rows, _LANE), lambda i: (0, i, 0)),  # x tile
        ],
        out_specs=pl.BlockSpec((tile_rows, _LANE), lambda i: (i, 0)),
        compiler_params=pltpu.CompilerParams(
            dimension_semantics=("parallel",),
            vmem_limit_bytes=32 * 1024 * 1024,
        ),
    )(w_s, b_s, x3)

    y = out.reshape(-1)                            # free reshape
    if total != batch:
        y = y[:batch]                              # only copies when padded
    return y.reshape(batch, 1)


def init_params(key):
    """Mirror PyTorch _initialize_weights: weight ~ |N(0, 0.01)|,
    bias keeps nn.Linear's default U(-1/sqrt(fan_in), 1/sqrt(fan_in))."""
    kw, kb = jax.random.split(key)
    weight = jnp.abs(0.01 * jax.random.normal(kw, (1, 2), dtype=jnp.float32))
    bound = 1.0 / jnp.sqrt(2.0)
    bias = jax.random.uniform(kb, (1,), dtype=jnp.float32,
                              minval=-bound, maxval=bound)
    return weight, bias


def _reference(x, weight, bias):
    return jnp.maximum(x @ weight.T + bias, 0.0)


if __name__ == "__main__":
    key = jax.random.PRNGKey(0)
    k_x1, k_x2, k_x3, k_p = jax.random.split(key, 4)

    weight, bias = init_params(k_p)

    # 1) Small demo batch in the module's native (B, 2) layout.
    B1 = 8
    x1 = jax.random.normal(k_x1, (B1, 2), dtype=jnp.float32)
    out1 = jax.block_until_ready(pruning_acc_estimator_forward(x1, weight, bias))
    assert out1.shape == (B1, 1)
    assert jnp.allclose(out1, _reference(x1, weight, bias), atol=1e-5)

    # 2) Ragged batch (not a multiple of 128) -> exercises padding + slice.
    B2 = 300
    x2 = jax.random.normal(k_x2, (B2, 2), dtype=jnp.float32)
    out2 = jax.block_until_ready(pruning_acc_estimator_forward(x2, weight, bias))
    assert out2.shape == (B2, 1)
    assert jnp.allclose(out2, _reference(x2, weight, bias), atol=1e-5)

    # 3) Multi-tile grid (>=2 steps) + feature-major fast path (no wrapper
    #    transpose / pad / slice).
    B3 = 4096
    x3 = jax.random.normal(k_x3, (B3, 2), dtype=jnp.float32)
    out3 = jax.block_until_ready(
        pruning_acc_estimator_forward(jnp.transpose(x3), weight, bias,
                                      feature_major=True))
    assert out3.shape == (B3, 1)
    assert jnp.allclose(out3, _reference(x3, weight, bias), atol=1e-5)

    print("KERNEL_OK")
</pallas_src>

<mosaic_0001>
module attributes {stable_mosaic.version = 11 : i64} {
  func.func @_linear2_relu_kernel(%arg0: i32, %arg1: memref<2xf32, #tpu.memory_space<smem>>, %arg2: memref<1xf32, #tpu.memory_space<smem>>, %arg3: memref<2x16x128xf32, #tpu.memory_space<vmem>>, %arg4: memref<16x128xf32, #tpu.memory_space<vmem>>) attributes {dimension_semantics = [#tpu.dimension_semantics<parallel>], iteration_bounds = array<i64: 1>, scalar_prefetch = 0 : i64, scratch_operands = 0 : i64, tpu.core_type = #tpu.core_type<tc>, window_params = [{transform_indices = @transform_0, window_bounds = array<i64: 2>}, {transform_indices = @transform_1, window_bounds = array<i64: 1>}, {transform_indices = @transform_2, window_bounds = array<i64: 2, 16, 128>}, {transform_indices = @transform_3, window_bounds = array<i64: 16, 128>}]} {
    %c0 = arith.constant 0 : index
    %c0_0 = arith.constant 0 : index
    %c0_1 = arith.constant 0 : index
    %0 = vector.load %arg3[%c0, %c0_0, %c0_1] : memref<2x16x128xf32, #tpu.memory_space<vmem>>, vector<1x16x128xf32>
    %1 = vector.shape_cast %0 : vector<1x16x128xf32> to vector<16x128xf32>
    %c1 = arith.constant 1 : index
    %c0_2 = arith.constant 0 : index
    %c0_3 = arith.constant 0 : index
    %2 = vector.load %arg3[%c1, %c0_2, %c0_3] : memref<2x16x128xf32, #tpu.memory_space<vmem>>, vector<1x16x128xf32>
    %3 = vector.shape_cast %2 : vector<1x16x128xf32> to vector<16x128xf32>
    %c0_4 = arith.constant 0 : index
    %4 = memref.load %arg1[%c0_4] : memref<2xf32, #tpu.memory_space<smem>>
    %5 = vector.broadcast %4 : f32 to vector<16x128xf32>
    %6 = arith.mulf %1, %5 : vector<16x128xf32>
    %c1_5 = arith.constant 1 : index
    %7 = memref.load %arg1[%c1_5] : memref<2xf32, #tpu.memory_space<smem>>
    %8 = vector.broadcast %7 : f32 to vector<16x128xf32>
    %9 = arith.mulf %3, %8 : vector<16x128xf32>
    %10 = arith.addf %6, %9 : vector<16x128xf32>
    %c0_6 = arith.constant 0 : index
    %11 = memref.load %arg2[%c0_6] : memref<1xf32, #tpu.memory_space<smem>>
    %12 = vector.broadcast %11 : f32 to vector<16x128xf32>
    %13 = arith.addf %10, %12 : vector<16x128xf32>
    %cst = arith.constant 0.000000e+00 : f32
    %14 = vector.broadcast %cst : f32 to vector<16x128xf32>
    %15 = arith.maximumf %13, %14 : vector<16x128xf32>
    %c0_7 = arith.constant 0 : index
    %c0_8 = arith.constant 0 : index
    %16 = vector.load %arg4[%c0_7, %c0_8] : memref<16x128xf32, #tpu.memory_space<vmem>>, vector<16x128xf32>
    tpu.vector_store %arg4[%c0_7, %c0_8], %15 {strides = array<i32>} : memref<16x128xf32, #tpu.memory_space<vmem>>, vector<16x128xf32>,
    return
  }
  func.func @transform_0(%arg0: i32) -> i32 {
    %c0_i32 = arith.constant 0 : i32
    %c0_i32_0 = arith.constant 0 : i32
    return %c0_i32 : i32
  }
  func.func @transform_1(%arg0: i32) -> i32 {
    %c0_i32 = arith.constant 0 : i32
    %c0_i32_0 = arith.constant 0 : i32
    return %c0_i32 : i32
  }
  func.func @transform_2(%arg0: i32) -> (i32, i32, i32) {
    %c0_i32 = arith.constant 0 : i32
    %c0_i32_0 = arith.constant 0 : i32
    %c0_i32_1 = arith.constant 0 : i32
    return %c0_i32, %arg0, %c0_i32_0 : i32, i32, i32
  }
  func.func @transform_3(%arg0: i32) -> (i32, i32) {
    %c0_i32 = arith.constant 0 : i32
    %c0_i32_0 = arith.constant 0 : i32
    return %arg0, %c0_i32 : i32, i32
  }
}

</mosaic_0001>

<llo_original>
// kernel: pruning_acc_estimator_forward.1
$region0: #{pruning_acc_estimator_forward.1}
  #allocation0 [shape = 'u32[]', space=smem, size = 0x4, offset = 0x4, fixed_abs, tag = 'smem constant byte address 0x4 - core index']
  #allocation1 [shape = 'u32[144,128]{1,0:T(1,128)}', space=vmem, size = 0x12000, scoped, tag = 'internal scratch']
  #allocation2 [shape = 'f32[1]{0:T(128)S(6)}', space=smem, size = 0x200, scoped, tag = 'scoped memory for pruning_acc_estimator_forward.1']
  %s0 = inlined_call_operand.vmem [shape: f32[2], index: 0, kind: input, shape index: {}]
  %s1 = inlined_call_operand.<no memory space> [shape: f32[1], index: 1, kind: input, shape index: {}]
  %s2 = inlined_call_operand.vmem [shape: f32[2,16,128], index: 2, kind: input, shape index: {}]
  %s3 = inlined_call_operand.vmem [shape: f32[16,128], index: 3, kind: output, shape index: {}]
  %s4 = sld [smem:[#allocation0]]
  $region26: #{pruning_acc_estimator_forward.1} parent=0
    _
  %s6 = ssub.s32 1, %s4
  %s7 = scalar_select 0, %s6, %s4
  %8 = sst [smem:[#allocation2]] %s1
  $region1: #{pruning_acc_estimator_forward.1} parent=0
    #allocation3 [shape = 'u8[512]{0}', space=smem, size = 0x200, scoped, tag = 'input window, operand 0, single buffered']
    #allocation4 [shape = 's32[1]{0}', space=sflag, size = 0x4, scoped, tag = 'scoped memory for pruning_acc_estimator_forward.1']
    %9 = vsyncpa [#allocation4], 0
    // Predicated region
    $region2: #{pruning_acc_estimator_forward.1} parent=1 // pred_check
      _
    $region3: #{pruning_acc_estimator_forward.1} parent=1 // pred_check_branch
      %11 = sbr.rel (0) target = $region5
    $region4: #{pruning_acc_estimator_forward.1} parent=1 // pred_region
      %s13 = ssub.s32 16, 16
      %14 = vsyncadd [#allocation4], %s13
      %s16 = sshll.u32 %s0, 4
      %s17 = int_to_ptr.vmem [resolvable:$true] %s16
      %19 = dma.vmem_to_smem %s17, 16, [#allocation3], [#allocation4]
    $region5: #{pruning_acc_estimator_forward.1} parent=1 // pred_fallthru
      _
    // Predicated region
    $region6: #{pruning_acc_estimator_forward.1} parent=1 // pred_check
      _
    $region7: #{pruning_acc_estimator_forward.1} parent=1 // pred_check_branch
      %21 = sbr.rel (0) target = $region9
    $region8: #{pruning_acc_estimator_forward.1} parent=1 // pred_region
      _
    $region9: #{pruning_acc_estimator_forward.1} parent=1 // pred_fallthru
      _
    // Predicated region
    $region10: #{pruning_acc_estimator_forward.1} parent=1 // pred_check
      _
    $region11: #{pruning_acc_estimator_forward.1} parent=1 // pred_check_branch
      %23 = sbr.rel (0) target = $region13
    $region12: #{pruning_acc_estimator_forward.1} parent=1 // pred_region
      _
    $region13: #{pruning_acc_estimator_forward.1} parent=1 // pred_fallthru
      _
    // Predicated region
    $region14: #{pruning_acc_estimator_forward.1} parent=1 // pred_check
      _
    $region15: #{pruning_acc_estimator_forward.1} parent=1 // pred_check_branch
      %25 = sbr.rel (0) target = $region17
    $region16: #{pruning_acc_estimator_forward.1} parent=1 // pred_region
      %26 = dma.done [#allocation4], 16
    $region17: #{pruning_acc_estimator_forward.1} parent=1 // pred_fallthru
      _
    %27 = sfence
    %v28 = vld [vmem:[%s2] sm:$0xff]
    %v29 = vld [vmem:[%s2 + $0x8] sm:$0xff]
    %s30 = scalar_lea.vmem %s2, 16
    %v31 = vld [vmem:[%s30] sm:$0xff]
    %v32 = vld [vmem:[%s30 + $0x8] sm:$0xff]
    %s33 = sld [smem:[#allocation3]]
    %v34 = vstv %s33
    %v35 = vmul.f32 %v28, %v34
    %v36 = vmul.f32 %v29, %v34
    %s37 = sld [smem:[#allocation3 + $0x1]]
    %v38 = vstv %s37
    %v39 = vmul.f32 %v31, %v38
    %v40 = vmul.f32 %v32, %v38
    %v41 = vadd.f32 %v35, %v39
    %v42 = vadd.f32 %v36, %v40
    %s43 = sld [smem:[#allocation2]]
    %v44 = vstv %s43
    %v45 = vadd.f32 %v41, %v44
    %v46 = vadd.f32 %v42, %v44
    %v47 = vmax.f32 %v45, 0.0
    %v48 = vmax.f32 %v46, 0.0
    %49 = vst [vmem:[%s3] sm:$0xff] %v47
    %50 = vst [vmem:[%s3 + $0x8] sm:$0xff] %v48
    // Predicated region
    $region18: #{pruning_acc_estimator_forward.1} parent=1 // pred_check
      _
    $region19: #{pruning_acc_estimator_forward.1} parent=1 // pred_check_branch
      %52 = sbr.rel (0) target = $region21
    $region20: #{pruning_acc_estimator_forward.1} parent=1 // pred_region
      _
    $region21: #{pruning_acc_estimator_forward.1} parent=1 // pred_fallthru
      _
    // Predicated region
    $region22: #{pruning_acc_estimator_forward.1} parent=1 // pred_check
      _
    $region23: #{pruning_acc_estimator_forward.1} parent=1 // pred_check_branch
      %54 = sbr.rel (0) target = $region25
    $region24: #{pruning_acc_estimator_forward.1} parent=1 // pred_region
      _
    $region25: #{pruning_acc_estimator_forward.1} parent=1 // pred_fallthru
      _
    %55 = vsyncpa [#allocation4], 1

</llo_original>
